<compile_context>
chip_gen: v6e
topology: v6e:2x2x1
jax: 0.10.0
libtpu: 0.0.40
codegen_flags: <defaults>
</compile_context>

<pallas_src>
import jax
import jax.numpy as jnp
from jax import lax
from jax.experimental import pallas as pl
from jax.experimental.pallas import tpu as pltpu


def _round_up(x, m):
    return ((x + m - 1) // m) * m


def _mf_kernel(x1_ref, x2_ref, w1t_ref, w2t_ref, out_ref):
    """x1/x2: (1, NPAD) int32 VMEM; w1t/w2t: (2D, D) f32 VMEM;
    out: (1, NPAD) f32 VMEM (lane-dense)."""
    d = w1t_ref.shape[1]
    npad = out_ref.shape[1]

    # One-hot selectors: oh[k, n] = (k == x[n]); D on sublanes, N on lanes.
    d_iota = lax.broadcasted_iota(jnp.int32, (d, npad), 0)
    oh1 = (d_iota == x1_ref[...]).astype(jnp.float32)      # (D, NPAD)
    oh2 = (d_iota == x2_ref[...]).astype(jnp.float32)      # (D, NPAD)

    # Gather-by-matmul on the MXU (N*D*2D flops, trivially cheap):
    #   a[f, n] = W1[x1[n], f] = [U[x1[n], :], V[x1[n], :]]
    #   b[f, n] = W2[x2[n], f] = [U[x2[n], :], -V[x2[n], :]]
    a = jnp.dot(w1t_ref[...], oh1, preferred_element_type=jnp.float32)  # (2D, NPAD)
    b = jnp.dot(w2t_ref[...], oh2, preferred_element_type=jnp.float32)  # (2D, NPAD)

    # out[n] = sum_f a[f, n] * b[f, n] = <U[x1],U[x2]> - <V[x1],V[x2]>.
    # Reduction runs over sublanes -> result is already lane-dense (1, NPAD).
    out_ref[...] = jnp.sum(a * b, axis=0, keepdims=True)


def matrix_factorization_forward(u, v, x1, x2):
    """Equivalent of MatrixFactorization.forward(x1, x2) with params u, v."""
    d = u.shape[0]
    x1b, x2b = jnp.broadcast_arrays(x1, x2)     # PyTorch advanced-indexing broadcast
    out_shape = x1b.shape
    x1f = x1b.reshape(-1).astype(jnp.int32)
    x2f = x2b.reshape(-1).astype(jnp.int32)
    n = x1f.shape[0]
    if n == 0:                                   # empty-index fast path: no launch
        return jnp.zeros(out_shape, jnp.float32)

    # Mimic PyTorch's wrapping of valid negative indices; clamp keeps the
    # in-kernel one-hot math in range.
    # TODO(synk): PyTorch raises IndexError for truly out-of-range indices;
    # here they are clamped instead.
    x1f = jnp.clip(jnp.where(x1f < 0, x1f + d, x1f), 0, d - 1)
    x2f = jnp.clip(jnp.where(x2f < 0, x2f + d, x2f), 0, d - 1)

    npad = max(_round_up(n, 128), 128)           # lane-dense width
    x1p = jnp.pad(x1f, (0, npad - n)).reshape(1, npad)
    x2p = jnp.pad(x2f, (0, npad - n)).reshape(1, npad)

    # Fuse the subtract into the contraction: W1T = [U.T; V.T], W2T = [U.T; -V.T].
    uf = u.astype(jnp.float32)
    vf = v.astype(jnp.float32)
    w1t = jnp.concatenate([uf.T, vf.T], axis=0)   # (2D, D)
    w2t = jnp.concatenate([uf.T, -vf.T], axis=0)  # (2D, D)

    out = pl.pallas_call(
        _mf_kernel,
        out_shape=jax.ShapeDtypeStruct((1, npad), jnp.float32),
        grid_spec=pltpu.PrefetchScalarGridSpec(
            num_scalar_prefetch=0,
            grid=(1,),                            # tiny problem: one step
            in_specs=[
                pl.BlockSpec((1, npad), lambda i: (0, 0)),      # x1 (int32)
                pl.BlockSpec((1, npad), lambda i: (0, 0)),      # x2 (int32)
                pl.BlockSpec((2 * d, d), lambda i: (0, 0)),     # W1T
                pl.BlockSpec((2 * d, d), lambda i: (0, 0)),     # W2T
            ],
            out_specs=pl.BlockSpec((1, npad), lambda i: (0, 0)),
        ),
        compiler_params=pltpu.CompilerParams(
            dimension_semantics=("arbitrary",)),
    )(x1p, x2p, w1t, w2t)
    return out[0, :n].reshape(out_shape)


if __name__ == "__main__":
    alpha = 0.5
    dimD = 32

    key = jax.random.PRNGKey(0)
    ku, kv, k1, k2 = jax.random.split(key, 4)

    # Deterministic parameter init: alpha * eye (as in __init__) plus a small
    # deterministic perturbation so the result is non-trivial.
    U = alpha * jnp.eye(dimD, dtype=jnp.float32) + 0.01 * jax.random.normal(
        ku, (dimD, dimD), dtype=jnp.float32)
    V = alpha * jnp.eye(dimD, dtype=jnp.float32) + 0.01 * jax.random.normal(
        kv, (dimD, dimD), dtype=jnp.float32)

    # Index inputs (small shapes): x1, x2 of shape (2, 4) with values in [0, dimD).
    x1 = jax.random.randint(k1, (2, 4), 0, dimD, dtype=jnp.int32)
    x2 = jax.random.randint(k2, (2, 4), 0, dimD, dtype=jnp.int32)

    out = matrix_factorization_forward(U, V, x1, x2)
    out = jax.block_until_ready(out)

    # Pure-JAX reference for correctness.
    M_ref = U @ U.T - V @ V.T
    ref = M_ref[x1, x2]
    assert out.shape == ref.shape, (out.shape, ref.shape)
    assert jnp.allclose(out, ref, atol=1e-5, rtol=1e-5), (out, ref)

    print("KERNEL_OK")
</pallas_src>

<mosaic_0001>
module attributes {stable_mosaic.version = 11 : i64} {
  func.func @_mf_kernel(%arg0: i32, %arg1: memref<1x128xi32, #tpu.memory_space<vmem>>, %arg2: memref<1x128xi32, #tpu.memory_space<vmem>>, %arg3: memref<64x32xf32, #tpu.memory_space<vmem>>, %arg4: memref<64x32xf32, #tpu.memory_space<vmem>>, %arg5: memref<1x128xf32, #tpu.memory_space<vmem>>) attributes {dimension_semantics = [#tpu.dimension_semantics<arbitrary>], iteration_bounds = array<i64: 1>, scalar_prefetch = 0 : i64, scratch_operands = 0 : i64, tpu.core_type = #tpu.core_type<tc>, window_params = [{pipeline_mode = #tpu.pipeline_mode<synchronous>, transform_indices = @transform_0, window_bounds = array<i64: 1, 128>}, {pipeline_mode = #tpu.pipeline_mode<synchronous>, transform_indices = @transform_1, window_bounds = array<i64: 1, 128>}, {pipeline_mode = #tpu.pipeline_mode<synchronous>, transform_indices = @transform_2, window_bounds = array<i64: 64, 32>}, {pipeline_mode = #tpu.pipeline_mode<synchronous>, transform_indices = @transform_3, window_bounds = array<i64: 64, 32>}, {pipeline_mode = #tpu.pipeline_mode<synchronous>, transform_indices = @transform_4, window_bounds = array<i64: 1, 128>}]} {
    %0 = tpu.iota {dimensions = array<i32: 0>} : vector<32x128xi32>
    %c0 = arith.constant 0 : index
    %c0_0 = arith.constant 0 : index
    %1 = vector.load %arg1[%c0, %c0_0] : memref<1x128xi32, #tpu.memory_space<vmem>>, vector<1x128xi32>
    %2 = vector.broadcast %1 : vector<1x128xi32> to vector<32x128xi32>
    %3 = arith.cmpi eq, %0, %2 : vector<32x128xi32>
    %4 = arith.extui %3 : vector<32x128xi1> to vector<32x128xi32>
    %5 = arith.sitofp %4 : vector<32x128xi32> to vector<32x128xf32>
    %c0_1 = arith.constant 0 : index
    %c0_2 = arith.constant 0 : index
    %6 = vector.load %arg2[%c0_1, %c0_2] : memref<1x128xi32, #tpu.memory_space<vmem>>, vector<1x128xi32>
    %7 = vector.broadcast %6 : vector<1x128xi32> to vector<32x128xi32>
    %8 = arith.cmpi eq, %0, %7 : vector<32x128xi32>
    %9 = arith.extui %8 : vector<32x128xi1> to vector<32x128xi32>
    %10 = arith.sitofp %9 : vector<32x128xi32> to vector<32x128xf32>
    %c0_3 = arith.constant 0 : index
    %c0_4 = arith.constant 0 : index
    %11 = vector.load %arg3[%c0_3, %c0_4] : memref<64x32xf32, #tpu.memory_space<vmem>>, vector<64x32xf32>
    %cst = arith.constant dense<0.000000e+00> : vector<64x128xf32>
    %12 = tpu.matmul %11, %5, %cst {dimension_numbers = #tpu.dot_dimension_numbers<[1], [0], [0], [1], [0, 0, 1, 1], [], []>} : vector<64x32xf32>, vector<32x128xf32>, vector<64x128xf32> -> vector<64x128xf32>
    %c0_5 = arith.constant 0 : index
    %c0_6 = arith.constant 0 : index
    %13 = vector.load %arg4[%c0_5, %c0_6] : memref<64x32xf32, #tpu.memory_space<vmem>>, vector<64x32xf32>
    %cst_7 = arith.constant dense<0.000000e+00> : vector<64x128xf32>
    %14 = tpu.matmul %13, %10, %cst_7 {dimension_numbers = #tpu.dot_dimension_numbers<[1], [0], [0], [1], [0, 0, 1, 1], [], []>} : vector<64x32xf32>, vector<32x128xf32>, vector<64x128xf32> -> vector<64x128xf32>
    %15 = arith.mulf %12, %14 : vector<64x128xf32>
    %cst_8 = arith.constant dense<0.000000e+00> : vector<128xf32>
    %16 = vector.multi_reduction <add>, %15, %cst_8 [0] : vector<64x128xf32> to vector<128xf32>
    %17 = vector.shape_cast %16 : vector<128xf32> to vector<1x128xf32>
    %c0_9 = arith.constant 0 : index
    %c0_10 = arith.constant 0 : index
    %18 = vector.load %arg5[%c0_9, %c0_10] : memref<1x128xf32, #tpu.memory_space<vmem>>, vector<1x128xf32>
    tpu.vector_store %arg5[%c0_9, %c0_10], %17 {strides = array<i32>} : memref<1x128xf32, #tpu.memory_space<vmem>>, vector<1x128xf32>,
    return
  }
  func.func @transform_0(%arg0: i32) -> (i32, i32) {
    %c0_i32 = arith.constant 0 : i32
    %c0_i32_0 = arith.constant 0 : i32
    %c0_i32_1 = arith.constant 0 : i32
    return %c0_i32, %c0_i32_0 : i32, i32
  }
  func.func @transform_1(%arg0: i32) -> (i32, i32) {
    %c0_i32 = arith.constant 0 : i32
    %c0_i32_0 = arith.constant 0 : i32
    %c0_i32_1 = arith.constant 0 : i32
    return %c0_i32, %c0_i32_0 : i32, i32
  }
  func.func @transform_2(%arg0: i32) -> (i32, i32) {
    %c0_i32 = arith.constant 0 : i32
    %c0_i32_0 = arith.constant 0 : i32
    %c0_i32_1 = arith.constant 0 : i32
    return %c0_i32, %c0_i32_0 : i32, i32
  }
  func.func @transform_3(%arg0: i32) -> (i32, i32) {
    %c0_i32 = arith.constant 0 : i32
    %c0_i32_0 = arith.constant 0 : i32
    %c0_i32_1 = arith.constant 0 : i32
    return %c0_i32, %c0_i32_0 : i32, i32
  }
  func.func @transform_4(%arg0: i32) -> (i32, i32) {
    %c0_i32 = arith.constant 0 : i32
    %c0_i32_0 = arith.constant 0 : i32
    %c0_i32_1 = arith.constant 0 : i32
    return %c0_i32, %c0_i32_0 : i32, i32
  }
}

</mosaic_0001>

<llo_original>
// kernel: tpu_custom_call.1
$region0: #{tpu_custom_call.1}
  #allocation0 [shape = 'u32[]', space=smem, size = 0x4, offset = 0x4, fixed_abs, tag = 'smem constant byte address 0x4 - core index']
  #allocation1 [shape = 'u32[144,128]{1,0:T(1,128)}', space=vmem, size = 0x12000, scoped, tag = 'internal scratch']
  %s0 = inlined_call_operand.vmem [shape: s32[1,128], index: 0, kind: input, shape index: {}]
  %s1 = inlined_call_operand.vmem [shape: s32[1,128], index: 1, kind: input, shape index: {}]
  %s2 = inlined_call_operand.vmem [shape: f32[64,32], index: 2, kind: input, shape index: {}]
  %s3 = inlined_call_operand.vmem [shape: f32[64,32], index: 3, kind: input, shape index: {}]
  %s4 = inlined_call_operand.hbm [shape: f32[1,128], index: 4, kind: output, shape index: {}]
  %s5 = sld [smem:[#allocation0]]
  $region26: #{tpu_custom_call.1} parent=0
    _
  %s7 = ssub.s32 1, %s5
  %s8 = scalar_select 0, %s7, %s5
  $region1: #{tpu_custom_call.1} parent=0
    #allocation2 [shape = 'u8[512]{0}', space=vmem, size = 0x400, scoped, tag = 'output window, operand 0, single buffered']
    #allocation3 [shape = 's32[1]{0}', space=sflag, size = 0x4, scoped, tag = 'scoped memory for tpu_custom_call.1']
    %9 = vsyncpa [#allocation3], 0
    // Predicated region
    $region2: #{tpu_custom_call.1} parent=1 // pred_check
      _
    $region3: #{tpu_custom_call.1} parent=1 // pred_check_branch
      %11 = sbr.rel (0) target = $region5
    $region4: #{tpu_custom_call.1} parent=1 // pred_region
      _
    $region5: #{tpu_custom_call.1} parent=1 // pred_fallthru
      _
    // Predicated region
    $region6: #{tpu_custom_call.1} parent=1 // pred_check
      _
    $region7: #{tpu_custom_call.1} parent=1 // pred_check_branch
      %13 = sbr.rel (0) target = $region9
    $region8: #{tpu_custom_call.1} parent=1 // pred_region
      _
    $region9: #{tpu_custom_call.1} parent=1 // pred_fallthru
      _
    // Predicated region
    $region10: #{tpu_custom_call.1} parent=1 // pred_check
      _
    $region11: #{tpu_custom_call.1} parent=1 // pred_check_branch
      %15 = sbr.rel (0) target = $region13
    $region12: #{tpu_custom_call.1} parent=1 // pred_region
      _
    $region13: #{tpu_custom_call.1} parent=1 // pred_fallthru
      _
    // Predicated region
    $region14: #{tpu_custom_call.1} parent=1 // pred_check
      _
    $region15: #{tpu_custom_call.1} parent=1 // pred_check_branch
      %17 = sbr.rel (0) target = $region17
    $region16: #{tpu_custom_call.1} parent=1 // pred_region
      _
    $region17: #{tpu_custom_call.1} parent=1 // pred_fallthru
      _
    %v18 = vlaneseq
    %v19 = vshrl.u32 %v18, 7
    %v20 = vadd.s32 %v19, 8
    %v21 = vadd.s32 %v19, 16
    %v22 = vadd.s32 %v19, 24
    %v23 = vld [vmem:[%s0] sm:$0x1]
    %v24 = vlaneseq
    %v25 = vshrl.u32 %v24, 7
    %v26 = vsub.s32 0, %v25
    %v27 = vrot.slane %v23, %v26
    %vm28 = vcmp.eq.s32.totalorder %v19, %v27
    %vm29 = vcmp.eq.s32.totalorder %v20, %v27
    %vm30 = vcmp.eq.s32.totalorder %v21, %v27
    %vm31 = vcmp.eq.s32.totalorder %v22, %v27
    %v32 = vsel %vm28, 1, 0
    %v33 = vsel %vm29, 1, 0
    %v34 = vsel %vm30, 1, 0
    %v35 = vsel %vm31, 1, 0
    %v36 = vcvt.s32.f32 %v32
    %v37 = vcvt.s32.f32 %v33
    %v38 = vcvt.s32.f32 %v34
    %v39 = vcvt.s32.f32 %v35
    %v40 = vld [vmem:[%s1] sm:$0x1]
    %v41 = vlaneseq
    %v42 = vshrl.u32 %v41, 7
    %v43 = vsub.s32 0, %v42
    %v44 = vrot.slane %v40, %v43
    %vm45 = vcmp.eq.s32.totalorder %v19, %v44
    %vm46 = vcmp.eq.s32.totalorder %v20, %v44
    %vm47 = vcmp.eq.s32.totalorder %v21, %v44
    %vm48 = vcmp.eq.s32.totalorder %v22, %v44
    %v49 = vsel %vm45, 1, 0
    %v50 = vsel %vm46, 1, 0
    %v51 = vsel %vm47, 1, 0
    %v52 = vsel %vm48, 1, 0
    %v53 = vcvt.s32.f32 %v49
    %v54 = vcvt.s32.f32 %v50
    %v55 = vcvt.s32.f32 %v51
    %v56 = vcvt.s32.f32 %v52
    %v57 = vld [vmem:[%s2] sm:$0xff]
    %v58 = vld [vmem:[%s2 + $0x8] sm:$0xff]
    %v59 = vld [vmem:[%s2 + $0x10] sm:$0xff]
    %v60 = vld [vmem:[%s2 + $0x18] sm:$0xff]
    %v61 = vld [vmem:[%s2 + $0x20] sm:$0xff]
    %v62 = vld [vmem:[%s2 + $0x28] sm:$0xff]
    %v63 = vld [vmem:[%s2 + $0x30] sm:$0xff]
    %v64 = vld [vmem:[%s2 + $0x38] sm:$0xff]
    %vm65 = vcmask 261120
    %v67 = vsel %vm65, %v57, 0
    %v70 = vsel %vm65, %v58, 0
    %v73 = vsel %vm65, %v59, 0
    %v76 = vsel %vm65, %v60, 0
    %v79 = vsel %vm65, %v61, 0
    %v82 = vsel %vm65, %v62, 0
    %v85 = vsel %vm65, %v63, 0
    %v88 = vsel %vm65, %v64, 0
    %90 = vmatprep.subr.mxu0 0.0
    %91 = vmatpush1.msra.mxu0 0.0
    %92 = vmatprep.subr.mxu0 0.0
    %93 = vmatpush1.msra.mxu0 0.0
    %94 = vmatprep.subr.mxu0 0.0
    %95 = vmatpush1.msra.mxu0 0.0
    %96 = vmatprep.subr.mxu0 0.0
    %97 = vmatpush1.msra.mxu0 0.0
    %98 = vmatprep.subr.mxu0 0.0
    %99 = vmatpush1.msra.mxu0 0.0
    %100 = vmatprep.subr.mxu0 0.0
    %101 = vmatpush1.msra.mxu0 0.0
    %102 = vmatprep.subr.mxu0 0.0
    %103 = vmatpush1.msra.mxu0 0.0
    %104 = vmatprep.subr.mxu0 0.0
    %105 = vmatpush1.msra.mxu0 0.0
    %106 = vmatprep.subr.mxu0 0.0
    %107 = vmatpush1.msra.mxu0 0.0
    %108 = vmatprep.subr.mxu0 0.0
    %109 = vmatpush1.msra.mxu0 0.0
    %110 = vmatprep.subr.mxu0 0.0
    %111 = vmatpush1.msra.mxu0 0.0
    %112 = vmatprep.subr.mxu0 0.0
    %113 = vmatpush1.msra.mxu0 0.0
    %114 = vmatprep.subr.mxu0 0.0
    %115 = vmatpush1.msra.mxu0 %v39
    %116 = vmatprep.subr.mxu0 0.0
    %117 = vmatpush1.msra.mxu0 %v38
    %118 = vmatprep.subr.mxu0 0.0
    %119 = vmatpush1.msra.mxu0 %v37
    %120 = vmatprep.subr.mxu0 0.0
    %121 = vmatpush1.msra.mxu0 %v36
    %122 = vmatprep.subr.mxu0 0.0
    %123 = vmatpush2.msra.mxu0 0.0
    %124 = vmatprep.subr.mxu0 0.0
    %125 = vmatpush2.msra.mxu0 0.0
    %126 = vmatprep.subr.mxu0 0.0
    %127 = vmatpush2.msra.mxu0 0.0
    %128 = vmatprep.subr.mxu0 0.0
    %129 = vmatpush2.msra.mxu0 0.0
    %130 = vmatprep.subr.mxu0 0.0
    %131 = vmatpush2.msra.mxu0 0.0
    %132 = vmatprep.subr.mxu0 0.0
    %133 = vmatpush2.msra.mxu0 0.0
    %134 = vmatprep.subr.mxu0 0.0
    %135 = vmatpush2.msra.mxu0 0.0
    %136 = vmatprep.subr.mxu0 0.0
    %137 = vmatpush2.msra.mxu0 0.0
    %138 = vmatprep.subr.mxu0 0.0
    %139 = vmatpush2.msra.mxu0 0.0
    %140 = vmatprep.subr.mxu0 0.0
    %141 = vmatpush2.msra.mxu0 0.0
    %142 = vmatprep.subr.mxu0 0.0
    %143 = vmatpush2.msra.mxu0 0.0
    %144 = vmatprep.subr.mxu0 0.0
    %145 = vmatpush2.msra.mxu0 0.0
    %146 = vmatprep.subr.mxu0 0.0
    %147 = vmatpush2.msra.mxu0 0.0
    %148 = vmatprep.subr.mxu0 0.0
    %149 = vmatpush2.msra.mxu0 0.0
    %150 = vmatprep.subr.mxu0 0.0
    %151 = vmatpush2.msra.mxu0 0.0
    %152 = vmatprep.subr.mxu0 0.0
    %153 = vmatpush2.msra.mxu0 0.0
    %154 = vmatprep.mubr.f32.mxu0 0.0
    %155 = vmatmul.mubr.f32.gmra.mxu0 %v67
    %v156 = vpop.f32.mrf.mxu0
    %v157 = vadd.f32 0.0, %v156
    %v158 = vpop.f32.mrf.mxu0
    %159 = vmatprep.mubr.f32.mxu0 0.0
    %160 = vmatmul.mubr.f32.gmra.mxu0 %v70
    %v161 = vpop.f32.mrf.mxu0
    %v162 = vadd.f32 0.0, %v161
    %v163 = vpop.f32.mrf.mxu0
    %164 = vmatprep.mubr.f32.mxu0 0.0
    %165 = vmatmul.mubr.f32.gmra.mxu0 %v73
    %v166 = vpop.f32.mrf.mxu0
    %v167 = vadd.f32 0.0, %v166
    %v168 = vpop.f32.mrf.mxu0
    %169 = vmatprep.mubr.f32.mxu0 0.0
    %170 = vmatmul.mubr.f32.gmra.mxu0 %v76
    %v171 = vpop.f32.mrf.mxu0
    %v172 = vadd.f32 0.0, %v171
    %v173 = vpop.f32.mrf.mxu0
    %174 = vmatprep.mubr.f32.mxu0 0.0
    %175 = vmatmul.mubr.f32.gmra.mxu0 %v79
    %v176 = vpop.f32.mrf.mxu0
    %v177 = vadd.f32 0.0, %v176
    %v178 = vpop.f32.mrf.mxu0
    %179 = vmatprep.mubr.f32.mxu0 0.0
    %180 = vmatmul.mubr.f32.gmra.mxu0 %v82
    %v181 = vpop.f32.mrf.mxu0
    %v182 = vadd.f32 0.0, %v181
    %v183 = vpop.f32.mrf.mxu0
    %184 = vmatprep.mubr.f32.mxu0 0.0
    %185 = vmatmul.mubr.f32.gmra.mxu0 %v85
    %v186 = vpop.f32.mrf.mxu0
    %v187 = vadd.f32 0.0, %v186
    %v188 = vpop.f32.mrf.mxu0
    %189 = vmatprep.mubr.f32.mxu0 0.0
    %190 = vmatmul.mubr.f32.gmra.mxu0 %v88
    %v191 = vpop.f32.mrf.mxu0
    %v192 = vadd.f32 0.0, %v191
    %v193 = vpop.f32.mrf.mxu0
    %194 = vdwg.mxu0
    %v195 = vld [vmem:[%s3] sm:$0xff]
    %v196 = vld [vmem:[%s3 + $0x8] sm:$0xff]
    %v197 = vld [vmem:[%s3 + $0x10] sm:$0xff]
    %v198 = vld [vmem:[%s3 + $0x18] sm:$0xff]
    %v199 = vld [vmem:[%s3 + $0x20] sm:$0xff]
    %v200 = vld [vmem:[%s3 + $0x28] sm:$0xff]
    %v201 = vld [vmem:[%s3 + $0x30] sm:$0xff]
    %v202 = vld [vmem:[%s3 + $0x38] sm:$0xff]
    %v204 = vsel %vm65, %v195, 0
    %v207 = vsel %vm65, %v196, 0
    %v210 = vsel %vm65, %v197, 0
    %v213 = vsel %vm65, %v198, 0
    %v216 = vsel %vm65, %v199, 0
    %v219 = vsel %vm65, %v200, 0
    %v222 = vsel %vm65, %v201, 0
    %v225 = vsel %vm65, %v202, 0
    %227 = vmatprep.subr.mxu0 0.0
    %228 = vmatpush1.msra.mxu0 0.0
    %229 = vmatprep.subr.mxu0 0.0
    %230 = vmatpush1.msra.mxu0 0.0
    %231 = vmatprep.subr.mxu0 0.0
    %232 = vmatpush1.msra.mxu0 0.0
    %233 = vmatprep.subr.mxu0 0.0
    %234 = vmatpush1.msra.mxu0 0.0
    %235 = vmatprep.subr.mxu0 0.0
    %236 = vmatpush1.msra.mxu0 0.0
    %237 = vmatprep.subr.mxu0 0.0
    %238 = vmatpush1.msra.mxu0 0.0
    %239 = vmatprep.subr.mxu0 0.0
    %240 = vmatpush1.msra.mxu0 0.0
    %241 = vmatprep.subr.mxu0 0.0
    %242 = vmatpush1.msra.mxu0 0.0
    %243 = vmatprep.subr.mxu0 0.0
    %244 = vmatpush1.msra.mxu0 0.0
    %245 = vmatprep.subr.mxu0 0.0
    %246 = vmatpush1.msra.mxu0 0.0
    %247 = vmatprep.subr.mxu0 0.0
    %248 = vmatpush1.msra.mxu0 0.0
    %249 = vmatprep.subr.mxu0 0.0
    %250 = vmatpush1.msra.mxu0 0.0
    %251 = vmatprep.subr.mxu0 0.0
    %252 = vmatpush1.msra.mxu0 %v56
    %253 = vmatprep.subr.mxu0 0.0
    %254 = vmatpush1.msra.mxu0 %v55
    %255 = vmatprep.subr.mxu0 0.0
    %256 = vmatpush1.msra.mxu0 %v54
    %257 = vmatprep.subr.mxu0 0.0
    %258 = vmatpush1.msra.mxu0 %v53
    %259 = vmatprep.subr.mxu0 0.0
    %260 = vmatpush2.msra.mxu0 0.0
    %261 = vmatprep.subr.mxu0 0.0
    %262 = vmatpush2.msra.mxu0 0.0
    %263 = vmatprep.subr.mxu0 0.0
    %264 = vmatpush2.msra.mxu0 0.0
    %265 = vmatprep.subr.mxu0 0.0
    %266 = vmatpush2.msra.mxu0 0.0
    %267 = vmatprep.subr.mxu0 0.0
    %268 = vmatpush2.msra.mxu0 0.0
    %269 = vmatprep.subr.mxu0 0.0
    %270 = vmatpush2.msra.mxu0 0.0
    %271 = vmatprep.subr.mxu0 0.0
    %272 = vmatpush2.msra.mxu0 0.0
    %273 = vmatprep.subr.mxu0 0.0
    %274 = vmatpush2.msra.mxu0 0.0
    %275 = vmatprep.subr.mxu0 0.0
    %276 = vmatpush2.msra.mxu0 0.0
    %277 = vmatprep.subr.mxu0 0.0
    %278 = vmatpush2.msra.mxu0 0.0
    %279 = vmatprep.subr.mxu0 0.0
    %280 = vmatpush2.msra.mxu0 0.0
    %281 = vmatprep.subr.mxu0 0.0
    %282 = vmatpush2.msra.mxu0 0.0
    %283 = vmatprep.subr.mxu0 0.0
    %284 = vmatpush2.msra.mxu0 0.0
    %285 = vmatprep.subr.mxu0 0.0
    %286 = vmatpush2.msra.mxu0 0.0
    %287 = vmatprep.subr.mxu0 0.0
    %288 = vmatpush2.msra.mxu0 0.0
    %289 = vmatprep.subr.mxu0 0.0
    %290 = vmatpush2.msra.mxu0 0.0
    %291 = vmatprep.mubr.f32.mxu0 0.0
    %292 = vmatmul.mubr.f32.gmra.mxu0 %v204
    %v293 = vpop.f32.mrf.mxu0
    %v294 = vadd.f32 0.0, %v293
    %v295 = vpop.f32.mrf.mxu0
    %296 = vmatprep.mubr.f32.mxu0 0.0
    %297 = vmatmul.mubr.f32.gmra.mxu0 %v207
    %v298 = vpop.f32.mrf.mxu0
    %v299 = vadd.f32 0.0, %v298
    %v300 = vpop.f32.mrf.mxu0
    %301 = vmatprep.mubr.f32.mxu0 0.0
    %302 = vmatmul.mubr.f32.gmra.mxu0 %v210
    %v303 = vpop.f32.mrf.mxu0
    %v304 = vadd.f32 0.0, %v303
    %v305 = vpop.f32.mrf.mxu0
    %306 = vmatprep.mubr.f32.mxu0 0.0
    %307 = vmatmul.mubr.f32.gmra.mxu0 %v213
    %v308 = vpop.f32.mrf.mxu0
    %v309 = vadd.f32 0.0, %v308
    %v310 = vpop.f32.mrf.mxu0
    %311 = vmatprep.mubr.f32.mxu0 0.0
    %312 = vmatmul.mubr.f32.gmra.mxu0 %v216
    %v313 = vpop.f32.mrf.mxu0
    %v314 = vadd.f32 0.0, %v313
    %v315 = vpop.f32.mrf.mxu0
    %316 = vmatprep.mubr.f32.mxu0 0.0
    %317 = vmatmul.mubr.f32.gmra.mxu0 %v219
    %v318 = vpop.f32.mrf.mxu0
    %v319 = vadd.f32 0.0, %v318
    %v320 = vpop.f32.mrf.mxu0
    %321 = vmatprep.mubr.f32.mxu0 0.0
    %322 = vmatmul.mubr.f32.gmra.mxu0 %v222
    %v323 = vpop.f32.mrf.mxu0
    %v324 = vadd.f32 0.0, %v323
    %v325 = vpop.f32.mrf.mxu0
    %326 = vmatprep.mubr.f32.mxu0 0.0
    %327 = vmatmul.mubr.f32.gmra.mxu0 %v225
    %v328 = vpop.f32.mrf.mxu0
    %v329 = vadd.f32 0.0, %v328
    %v330 = vpop.f32.mrf.mxu0
    %331 = vdwg.mxu0
    %v332 = vmul.f32 %v157, %v294
    %v333 = vmul.f32 %v162, %v299
    %v334 = vmul.f32 %v167, %v304
    %v335 = vmul.f32 %v172, %v309
    %v336 = vmul.f32 %v177, %v314
    %v337 = vmul.f32 %v182, %v319
    %v338 = vmul.f32 %v187, %v324
    %v339 = vmul.f32 %v192, %v329
    %v340 = vadd.f32 %v332, %v333
    %v341 = vadd.f32 %v340, %v334
    %v342 = vadd.f32 %v341, %v335
    %v343 = vadd.f32 %v342, %v336
    %v344 = vadd.f32 %v343, %v337
    %v345 = vadd.f32 %v344, %v338
    %v346 = vadd.f32 %v345, %v339
    %v347 = vrot.slane %v346, 4
    %v348 = vadd.f32 %v346, %v347
    %v349 = vrot.slane %v348, 2
    %v350 = vadd.f32 %v348, %v349
    %v351 = vrot.slane %v350, 1
    %v352 = vadd.f32 %v350, %v351
    %353 = vst [vmem:[#allocation2] sm:$0x1] %v352
    // Predicated region
    $region18: #{tpu_custom_call.1} parent=1 // pred_check
      _
    $region19: #{tpu_custom_call.1} parent=1 // pred_check_branch
      %355 = sbr.rel (0) target = $region21
    $region20: #{tpu_custom_call.1} parent=1 // pred_region
      %s357 = ssub.s32 16, 16
      %358 = vsyncadd [#allocation3], %s357
      %s360 = sshll.u32 [#allocation2], 4
      %s361 = int_to_ptr.vmem [resolvable:$true] %s360
      %363 = dma.vmem_to_hbm [thread:$0]  %s361, 16, %s4, [#allocation3]
    $region21: #{tpu_custom_call.1} parent=1 // pred_fallthru
      _
    // Predicated region
    $region22: #{tpu_custom_call.1} parent=1 // pred_check
      _
    $region23: #{tpu_custom_call.1} parent=1 // pred_check_branch
      %365 = sbr.rel (0) target = $region25
    $region24: #{tpu_custom_call.1} parent=1 // pred_region
      %366 = dma.done [#allocation3], 16
    $region25: #{tpu_custom_call.1} parent=1 // pred_fallthru
      _
    %367 = vsyncpa [#allocation3], 1

</llo_original>
